<compile_context>
chip_gen: v7x
topology: tpu7x:2x2x1
jax: 0.10.0
libtpu: 0.0.40
codegen_flags: <defaults>
</compile_context>

<pallas_src>
import functools

import jax
import jax.numpy as jnp
from jax.experimental import pallas as pl
from jax.experimental.pallas import tpu as pltpu

_LANE = 128
_SUBLANE = 8
# Total double-buffered block VMEM budget (all streams, both buffers).
_TARGET_TOTAL_BLOCK_BYTES = 20 * 1024 * 1024
_VMEM_LIMIT_BYTES = 32 * 1024 * 1024  # explicit: v5e default is only 16 MiB


def _compute_dtype(dtype):
    # bf16 math is fine on v6e/v7x VPUs; anything else computes in f32.
    if dtype in (jnp.dtype(jnp.float32), jnp.dtype(jnp.bfloat16)):
        return dtype
    return jnp.dtype(jnp.float32)


# ---------------------------------------------------------------- kernels ---

def _add_kernel(x_ref, res_ref, o_ref, *, cdtype):
    o_ref[...] = (x_ref[...].astype(cdtype) +
                  res_ref[...].astype(cdtype)).astype(o_ref.dtype)


def _dropout_add_tpu_prng_kernel(seed_ref, x_ref, res_ref, o_ref, *,
                                 threshold, scale, cdtype):
    # Multi-word seed (user seed, block id): independent stream per block,
    # deterministic and core-assignment-independent under "parallel".
    pltpu.prng_seed(seed_ref[0], pl.program_id(0))
    bits = pltpu.bitcast(pltpu.prng_random_bits(x_ref.shape), jnp.uint32)
    keep = bits >= jnp.uint32(threshold)
    x = x_ref[...].astype(cdtype) * jnp.asarray(scale, cdtype)
    r = res_ref[...].astype(cdtype)
    o_ref[...] = jnp.where(keep, x + r, r).astype(o_ref.dtype)


def _dropout_add_host_bits_kernel(x_ref, res_ref, bits_ref, o_ref, *,
                                  threshold, scale, cdtype):
    keep = bits_ref[...] >= jnp.uint32(threshold)
    x = x_ref[...].astype(cdtype) * jnp.asarray(scale, cdtype)
    r = res_ref[...].astype(cdtype)
    o_ref[...] = jnp.where(keep, x + r, r).astype(o_ref.dtype)


# ---------------------------------------------------------------- wrapper ---

def _choose_layout(total):
    """Pick a lane-dense 2-D slab (rows, cols) covering `total` elements."""
    for cols in (2048, 1024, 512, 256, 128):    # prefer wide slabs
        if total % cols == 0 and (total // cols) % _SUBLANE == 0:
            return total // cols, cols, 0
    chunk = _SUBLANE * _LANE                    # fallback: pad to (8,128) tile
    padded = -(-total // chunk) * chunk
    return padded // _LANE, _LANE, padded - total


def _choose_block_rows(rows, cols, itemsize, num_streams):
    # Size blocks so (num_streams streams x 2 buffers) stays within the
    # double-buffered VMEM budget.  At >=2 MiB/stream we are already at the
    # flat part of the measured HBM-roofline curve.
    per_stream = _TARGET_TOTAL_BLOCK_BYTES // (2 * num_streams)
    bytes_per_row = cols * max(int(itemsize), 4)
    br = max(_SUBLANE, (per_stream // bytes_per_row) // _SUBLANE * _SUBLANE)
    return min(rows, br)


def residual_connection(x, res, *, drop_prob=0.1, training=False, seed=0,
                        block_rows=None):
    """Pallas implementation of ResidualConnection.forward(x, res)."""
    assert x.shape == res.shape and x.dtype == res.dtype
    assert 0.0 <= float(drop_prob) < 1.0
    orig_shape = x.shape
    total = x.size

    rows, cols, pad = _choose_layout(total)
    xf = x.reshape(-1)
    rf = res.reshape(-1)
    if pad:
        xf = jnp.pad(xf, (0, pad))
        rf = jnp.pad(rf, (0, pad))
    x2 = xf.reshape(rows, cols)
    r2 = rf.reshape(rows, cols)

    apply_dropout = bool(training) and float(drop_prob) > 0.0
    on_tpu = jax.default_backend() == "tpu"
    num_streams = 4 if (apply_dropout and not on_tpu) else 3

    if block_rows is None:
        block_rows = _choose_block_rows(rows, cols, x.dtype.itemsize,
                                        num_streams)
    block_rows = min(int(block_rows), rows)
    assert block_rows % _SUBLANE == 0 or block_rows == rows
    grid = (pl.cdiv(rows, block_rows),)         # masked tail handled by Pallas

    cdtype = _compute_dtype(x.dtype)
    blk = (block_rows, cols)
    out_sds = jax.ShapeDtypeStruct((rows, cols), x.dtype)
    cparams = pltpu.CompilerParams(
        dimension_semantics=("parallel",),
        vmem_limit_bytes=_VMEM_LIMIT_BYTES,
    )

    if not apply_dropout:
        out2 = pl.pallas_call(
            functools.partial(_add_kernel, cdtype=cdtype),
            out_shape=out_sds,
            grid_spec=pltpu.PrefetchScalarGridSpec(
                num_scalar_prefetch=0,
                grid=grid,
                in_specs=[pl.BlockSpec(blk, lambda i: (i, 0)),
                          pl.BlockSpec(blk, lambda i: (i, 0))],
                out_specs=pl.BlockSpec(blk, lambda i: (i, 0)),
            ),
            compiler_params=cparams,
        )(x2, r2)
    else:
        threshold = min(int(round(float(drop_prob) * float(2 ** 32))),
                        2 ** 32 - 1)
        scale = 1.0 / (1.0 - float(drop_prob))

        if on_tpu:
            seed_arr = jnp.asarray([seed], dtype=jnp.int32)
            out2 = pl.pallas_call(
                functools.partial(_dropout_add_tpu_prng_kernel,
                                  threshold=threshold, scale=scale,
                                  cdtype=cdtype),
                out_shape=out_sds,
                grid_spec=pltpu.PrefetchScalarGridSpec(
                    num_scalar_prefetch=1,
                    grid=grid,
                    in_specs=[pl.BlockSpec(blk, lambda i, s: (i, 0)),
                              pl.BlockSpec(blk, lambda i, s: (i, 0))],
                    out_specs=pl.BlockSpec(blk, lambda i, s: (i, 0)),
                ),
                compiler_params=cparams,
            )(seed_arr, x2, r2)
        else:
            # Portable fallback (interpret / non-TPU backends): the TPU
            # hardware PRNG has no lowering here, so draw the bits outside.
            bits = jax.random.bits(jax.random.PRNGKey(seed), (rows, cols),
                                   dtype=jnp.uint32)
            out2 = pl.pallas_call(
                functools.partial(_dropout_add_host_bits_kernel,
                                  threshold=threshold, scale=scale,
                                  cdtype=cdtype),
                out_shape=out_sds,
                grid_spec=pltpu.PrefetchScalarGridSpec(
                    num_scalar_prefetch=0,
                    grid=grid,
                    in_specs=[pl.BlockSpec(blk, lambda i: (i, 0)),
                              pl.BlockSpec(blk, lambda i: (i, 0)),
                              pl.BlockSpec(blk, lambda i: (i, 0))],
                    out_specs=pl.BlockSpec(blk, lambda i: (i, 0)),
                ),
                compiler_params=cparams,
            )(x2, r2, bits)

    out_flat = out2.reshape(-1)
    if pad:
        out_flat = out_flat[:total]
    return out_flat.reshape(orig_shape)


if __name__ == "__main__":
    key = jax.random.PRNGKey(0)
    kx, kr = jax.random.split(key)
    # NCHW, matching the PyTorch convention for this repo's tensors.
    x = jax.random.normal(kx, (2, 4, 16, 16), dtype=jnp.float32)
    res = jax.random.normal(kr, (2, 4, 16, 16), dtype=jnp.float32)
    drop_prob = 0.1

    # Eval path (deterministic): out = x + res
    out_eval = jax.block_until_ready(
        residual_connection(x, res, drop_prob=drop_prob, training=False))
    assert out_eval.shape == x.shape and out_eval.dtype == x.dtype
    assert jnp.allclose(out_eval, x + res, atol=1e-6), "eval path mismatch"

    # Training path: out = inverted-dropout(x) + res (stochastic)
    out_train = jax.block_until_ready(
        residual_connection(x, res, drop_prob=drop_prob, training=True,
                            seed=1234))
    assert out_train.shape == x.shape and out_train.dtype == x.dtype
    # Sanity: every output element is either (x/(1-p) + res) or just res.
    kept = jnp.isclose(out_train, x / (1.0 - drop_prob) + res, atol=1e-5)
    dropped = jnp.isclose(out_train, res, atol=1e-5)
    assert bool(jnp.all(kept | dropped)), "training path produced invalid values"

    print("KERNEL_OK")
</pallas_src>

<mosaic_0001>
module attributes {stable_mosaic.version = 11 : i64} {
  func.func @_add_kernel(%arg0: i32, %arg1: memref<8x256xf32, #tpu.memory_space<vmem>>, %arg2: memref<8x256xf32, #tpu.memory_space<vmem>>, %arg3: memref<8x256xf32, #tpu.memory_space<vmem>>) attributes {dimension_semantics = [#tpu.dimension_semantics<parallel>], iteration_bounds = array<i64: 1>, scalar_prefetch = 0 : i64, scratch_operands = 0 : i64, tpu.core_type = #tpu.core_type<tc>, window_params = [{transform_indices = @transform_0, window_bounds = array<i64: 8, 256>}, {transform_indices = @transform_1, window_bounds = array<i64: 8, 256>}, {transform_indices = @transform_2, window_bounds = array<i64: 8, 256>}]} {
    %c0 = arith.constant 0 : index
    %c0_0 = arith.constant 0 : index
    %0 = vector.load %arg1[%c0, %c0_0] : memref<8x256xf32, #tpu.memory_space<vmem>>, vector<8x256xf32>
    %c0_1 = arith.constant 0 : index
    %c0_2 = arith.constant 0 : index
    %1 = vector.load %arg2[%c0_1, %c0_2] : memref<8x256xf32, #tpu.memory_space<vmem>>, vector<8x256xf32>
    %2 = arith.addf %0, %1 : vector<8x256xf32>
    %c0_3 = arith.constant 0 : index
    %c0_4 = arith.constant 0 : index
    %3 = vector.load %arg3[%c0_3, %c0_4] : memref<8x256xf32, #tpu.memory_space<vmem>>, vector<8x256xf32>
    tpu.vector_store %arg3[%c0_3, %c0_4], %2 {strides = array<i32>} : memref<8x256xf32, #tpu.memory_space<vmem>>, vector<8x256xf32>,
    return
  }
  func.func @transform_0(%arg0: i32) -> (i32, i32) {
    %c0_i32 = arith.constant 0 : i32
    %c0_i32_0 = arith.constant 0 : i32
    return %arg0, %c0_i32 : i32, i32
  }
  func.func @transform_1(%arg0: i32) -> (i32, i32) {
    %c0_i32 = arith.constant 0 : i32
    %c0_i32_0 = arith.constant 0 : i32
    return %arg0, %c0_i32 : i32, i32
  }
  func.func @transform_2(%arg0: i32) -> (i32, i32) {
    %c0_i32 = arith.constant 0 : i32
    %c0_i32_0 = arith.constant 0 : i32
    return %arg0, %c0_i32 : i32, i32
  }
}

</mosaic_0001>

<llo_original>
// kernel: tpu_custom_call.1
$region0: #{tpu_custom_call.1}
  #allocation0 [shape = 'u32[]', space=smem, size = 0x4, offset = 0x4, fixed_abs, tag = 'smem constant byte address 0x4 - core index']
  #allocation1 [shape = 'u32[144,128]{1,0:T(1,128)}', space=vmem, size = 0x12000, scoped, tag = 'internal scratch']
  %s0 = inlined_call_operand.hbm [shape: f32[8,256], index: 0, kind: input, shape index: {}]
  %s1 = inlined_call_operand.hbm [shape: f32[8,256], index: 1, kind: input, shape index: {}]
  %s2 = inlined_call_operand.hbm [shape: f32[8,256], index: 2, kind: output, shape index: {}]
  %s3 = sld [smem:[#allocation0]]
  $region26: #{tpu_custom_call.1} parent=0
    _
  %s5 = ssub.s32 1, %s3
  %s6 = scalar_select 0, %s5, %s3
  $region1: #{tpu_custom_call.1} parent=0
    #allocation2 [shape = 'u8[8192]{0}', space=vmem, size = 0x2000, scoped, tag = 'input window, operand 0, single buffered']
    #allocation3 [shape = 's32[1]{0}', space=sflag, size = 0x4, scoped, tag = 'scoped memory for tpu_custom_call.1']
    #allocation4 [shape = 's32[1]{0}', space=sflag, size = 0x4, scoped, tag = 'scoped memory for tpu_custom_call.1']
    #allocation5 [shape = 'u8[8192]{0}', space=vmem, size = 0x2000, scoped, tag = 'input window, operand 1, single buffered']
    #allocation6 [shape = 's32[1]{0}', space=sflag, size = 0x4, scoped, tag = 'scoped memory for tpu_custom_call.1']
    #allocation7 [shape = 'u8[8192]{0}', space=vmem, size = 0x2000, scoped, tag = 'output window, operand 0, single buffered']
    %7 = vsyncpa [#allocation3], 0
    %8 = vsyncpa [#allocation6], 0
    %9 = vsyncpa [#allocation4], 0
    // Predicated region
    $region2: #{tpu_custom_call.1} parent=1 // pred_check
      _
    $region3: #{tpu_custom_call.1} parent=1 // pred_check_branch
      %11 = sbr.rel (0) target = $region5
    $region4: #{tpu_custom_call.1} parent=1 // pred_region
      %s13 = ssub.s32 256, 256
      %14 = vsyncadd [#allocation3], %s13
      %s16 = sshll.u32 [#allocation2], 4
      %s17 = int_to_ptr.vmem [resolvable:$true] %s16
      %19 = dma.hbm_to_vmem [thread:$0]  %s0, 256, %s17, [#allocation3]
    $region5: #{tpu_custom_call.1} parent=1 // pred_fallthru
      _
    // Predicated region
    $region6: #{tpu_custom_call.1} parent=1 // pred_check
      _
    $region7: #{tpu_custom_call.1} parent=1 // pred_check_branch
      %21 = sbr.rel (0) target = $region9
    $region8: #{tpu_custom_call.1} parent=1 // pred_region
      %s23 = ssub.s32 256, 256
      %24 = vsyncadd [#allocation6], %s23
      %s26 = sshll.u32 [#allocation5], 4
      %s27 = int_to_ptr.vmem [resolvable:$true] %s26
      %29 = dma.hbm_to_vmem [thread:$0]  %s1, 256, %s27, [#allocation6]
    $region9: #{tpu_custom_call.1} parent=1 // pred_fallthru
      _
    // Predicated region
    $region10: #{tpu_custom_call.1} parent=1 // pred_check
      _
    $region11: #{tpu_custom_call.1} parent=1 // pred_check_branch
      %31 = sbr.rel (0) target = $region13
    $region12: #{tpu_custom_call.1} parent=1 // pred_region
      %32 = dma.done [#allocation3], 256
    $region13: #{tpu_custom_call.1} parent=1 // pred_fallthru
      _
    // Predicated region
    $region14: #{tpu_custom_call.1} parent=1 // pred_check
      _
    $region15: #{tpu_custom_call.1} parent=1 // pred_check_branch
      %34 = sbr.rel (0) target = $region17
    $region16: #{tpu_custom_call.1} parent=1 // pred_region
      %35 = dma.done [#allocation6], 256
    $region17: #{tpu_custom_call.1} parent=1 // pred_fallthru
      _
    %v36 = vld [vmem:[#allocation2] sm:$0xff]
    %v37 = vld [vmem:[#allocation2 + $0x8] sm:$0xff]
    %v38 = vld [vmem:[#allocation5] sm:$0xff]
    %v39 = vld [vmem:[#allocation5 + $0x8] sm:$0xff]
    %v40 = vadd.f32 %v36, %v38
    %v41 = vadd.f32 %v37, %v39
    %42 = vst [vmem:[#allocation7] sm:$0xff] %v40
    %43 = vst [vmem:[#allocation7 + $0x8] sm:$0xff] %v41
    // Predicated region
    $region18: #{tpu_custom_call.1} parent=1 // pred_check
      _
    $region19: #{tpu_custom_call.1} parent=1 // pred_check_branch
      %45 = sbr.rel (0) target = $region21
    $region20: #{tpu_custom_call.1} parent=1 // pred_region
      %s47 = ssub.s32 256, 256
      %48 = vsyncadd [#allocation4], %s47
      %s50 = sshll.u32 [#allocation7], 4
      %s51 = int_to_ptr.vmem [resolvable:$true] %s50
      %53 = dma.vmem_to_hbm [thread:$0]  %s51, 256, %s2, [#allocation4]
    $region21: #{tpu_custom_call.1} parent=1 // pred_fallthru
      _
    // Predicated region
    $region22: #{tpu_custom_call.1} parent=1 // pred_check
      _
    $region23: #{tpu_custom_call.1} parent=1 // pred_check_branch
      %55 = sbr.rel (0) target = $region25
    $region24: #{tpu_custom_call.1} parent=1 // pred_region
      %56 = dma.done [#allocation4], 256
    $region25: #{tpu_custom_call.1} parent=1 // pred_fallthru
      _
    %57 = vsyncpa [#allocation3], 1
    %58 = vsyncpa [#allocation6], 1
    %59 = vsyncpa [#allocation4], 1

</llo_original>
